<compile_context>
chip_gen: v7x
topology: tpu7x:2x2x1
jax: 0.10.0
libtpu: 0.0.40
codegen_flags: <defaults>
</compile_context>

<pallas_src>
import jax
import jax.numpy as jnp
from jax import lax
from jax.experimental import pallas as pl
from jax.experimental.pallas import tpu as pltpu


def attention_kernel(vI_ref, vQ_ref, wI_ref, wQ_ref, bias_ref, watt_ref,
                     batt_ref, out_ref):
    tb, r, d = vI_ref.shape
    k = wI_ref.shape[1]

    vI3 = vI_ref[...]                                  # (TB, R, d)
    vQ = vQ_ref[...]                                   # (TB, d)
    vI2 = vI3.reshape(tb * r, d)                       # sublane-dim merge, layout no-op

    # hI = vI @ W_img^T  as one wide MXU matmul over all TB*R regions.
    hI = jnp.dot(vI2, wI_ref[...], preferred_element_type=jnp.float32)       # (TB*R, k)
    # hQ = vQ @ W_qst^T + (b_img + b_qst)   (biases fused in the wrapper).
    hQ = (jnp.dot(vQ, wQ_ref[...], preferred_element_type=jnp.float32)
          + bias_ref[...])                                                   # (TB, k)

    hA = jnp.tanh(hI.reshape(tb, r, k) + hQ[:, None, :])                     # (TB, R, k) EUP

    # attention_ff: (.., k) -> (.., 1) as VPU mul + lane reduce (+ scalar bias).
    scores = jnp.sum(hA * watt_ref[...], axis=2, keepdims=True) + batt_ref[...]  # (TB, R, 1)

    # softmax over the region axis (sublanes); exact division for fidelity.
    m = jnp.max(scores, axis=1, keepdims=True)
    e = jnp.exp(scores - m)
    p = e / jnp.sum(e, axis=1, keepdims=True)          # (TB, R, 1)

    # attention-weighted sum of image regions + residual question vector.
    vI_new = jnp.sum(p * vI3, axis=1)                  # (TB, d)
    out_ref[...] = (vI_new + vQ).astype(out_ref.dtype)


def _pick_batch_tile(B, R, d, k, vmem_budget_bytes=48 << 20):
    """Largest divisor of B whose double-buffered working set fits a VMEM budget."""
    weights = 2 * d * k * 4                               # resident W_img^T, W_qst^T
    best = 1
    for tb in range(1, B + 1):
        if B % tb:
            continue
        slabs = (tb * R * d + 2 * tb * d) * 4 * 2         # vI, vQ, out (double-buffered)
        interm = 3 * tb * R * k * 4                       # hI / hA / broadcast headroom
        if weights + slabs + interm < vmem_budget_bytes:
            best = tb
    return best


def attention_forward(vI, vQ, w_img, b_img, w_qst, b_qst, w_att, b_att):
    """vI: (B, R, d) image region features; vQ: (B, d) question feature.
    Returns vQ_new: (B, d), matching Attention.forward."""
    B, R, d = vI.shape
    k = w_img.shape[0]
    assert w_img.shape == (k, d) and w_qst.shape == (k, d)
    assert w_att.shape == (1, k) and b_att.shape == (1,)

    f32 = jnp.float32
    vI = vI.astype(f32)
    vQ = vQ.astype(f32)
    wI_t = jnp.transpose(w_img).astype(f32)              # (d, k)
    wQ_t = jnp.transpose(w_qst).astype(f32)              # (d, k)
    bias = (b_img + b_qst).astype(f32).reshape(1, k)     # fused Linear biases
    watt = w_att.astype(f32).reshape(1, k)
    batt = b_att.astype(f32).reshape(1, 1)

    TB = _pick_batch_tile(B, R, d, k)

    grid_spec = pltpu.PrefetchScalarGridSpec(
        num_scalar_prefetch=0,
        grid=(B // TB,),
        in_specs=[
            pl.BlockSpec((TB, R, d), lambda i: (i, 0, 0)),   # vI batch tile
            pl.BlockSpec((TB, d), lambda i: (i, 0)),         # vQ batch tile
            pl.BlockSpec((d, k), lambda i: (0, 0)),          # W_img^T (VMEM resident)
            pl.BlockSpec((d, k), lambda i: (0, 0)),          # W_qst^T (VMEM resident)
            pl.BlockSpec((1, k), lambda i: (0, 0)),          # fused bias
            pl.BlockSpec((1, k), lambda i: (0, 0)),          # attention weight row
            pl.BlockSpec((1, 1), lambda i: (0, 0)),          # attention bias (scalar)
        ],
        out_specs=pl.BlockSpec((TB, d), lambda i: (i, 0)),
    )

    out = pl.pallas_call(
        attention_kernel,
        out_shape=jax.ShapeDtypeStruct((B, d), f32),
        grid_spec=grid_spec,
        compiler_params=pltpu.CompilerParams(
            dimension_semantics=("parallel",)),              # batch tiles independent
    )(vI, vQ, wI_t, wQ_t, bias, watt, batt)
    return out


def attention_reference(vI, vQ, w_img, b_img, w_qst, b_qst, w_att, b_att):
    """Pure-JAX replica of the PyTorch Attention.forward."""
    hI = jnp.einsum("brd,kd->brk", vI, w_img,
                    precision=lax.Precision.HIGHEST) + b_img
    hQ = (jnp.einsum("bd,kd->bk", vQ, w_qst,
                     precision=lax.Precision.HIGHEST) + b_qst)[:, None, :]
    hA = jnp.tanh(hI + hQ)
    scores = jnp.einsum("brk,ok->bro", hA, w_att,
                        precision=lax.Precision.HIGHEST)[..., 0] + b_att[0]
    p = jax.nn.softmax(scores, axis=-1)          # F.softmax over regions (dim=1)
    vI_new = jnp.sum(p[..., None] * vI, axis=1)
    return vI_new + vQ


if __name__ == "__main__":
    # Small, lane-aligned shapes consistent with the module (defaults d=1024, k=512).
    B, R, d, k = 2, 16, 128, 128

    key = jax.random.PRNGKey(0)
    k_vi, k_vq, k_wi, k_bi, k_wq, k_bq, k_wa, k_ba = jax.random.split(key, 8)

    vI = jax.random.normal(k_vi, (B, R, d), dtype=jnp.float32)
    vQ = jax.random.normal(k_vq, (B, d), dtype=jnp.float32)

    # nn.Linear-style uniform init, deterministic in-script.
    s_in = 1.0 / jnp.sqrt(d)
    w_img = jax.random.uniform(k_wi, (k, d), minval=-s_in, maxval=s_in, dtype=jnp.float32)
    b_img = jax.random.uniform(k_bi, (k,), minval=-s_in, maxval=s_in, dtype=jnp.float32)
    w_qst = jax.random.uniform(k_wq, (k, d), minval=-s_in, maxval=s_in, dtype=jnp.float32)
    b_qst = jax.random.uniform(k_bq, (k,), minval=-s_in, maxval=s_in, dtype=jnp.float32)
    s_att = 1.0 / jnp.sqrt(k)
    w_att = jax.random.uniform(k_wa, (1, k), minval=-s_att, maxval=s_att, dtype=jnp.float32)
    b_att = jax.random.uniform(k_ba, (1,), minval=-s_att, maxval=s_att, dtype=jnp.float32)

    out = attention_forward(vI, vQ, w_img, b_img, w_qst, b_qst, w_att, b_att)
    out = jax.block_until_ready(out)

    ref = attention_reference(vI, vQ, w_img, b_img, w_qst, b_qst, w_att, b_att)
    assert out.shape == (B, d)
    assert jnp.allclose(out, ref, atol=1e-4, rtol=1e-4), "mismatch vs. reference"

    print("KERNEL_OK")
</pallas_src>

<mosaic_0001>
module attributes {stable_mosaic.version = 11 : i64} {
  func.func @attention_kernel(%arg0: i32, %arg1: memref<2x16x128xf32, #tpu.memory_space<vmem>>, %arg2: memref<2x128xf32, #tpu.memory_space<vmem>>, %arg3: memref<128x128xf32, #tpu.memory_space<vmem>>, %arg4: memref<128x128xf32, #tpu.memory_space<vmem>>, %arg5: memref<1x128xf32, #tpu.memory_space<vmem>>, %arg6: memref<1x128xf32, #tpu.memory_space<vmem>>, %arg7: memref<1x1xf32, #tpu.memory_space<vmem>>, %arg8: memref<2x128xf32, #tpu.memory_space<vmem>>) attributes {dimension_semantics = [#tpu.dimension_semantics<parallel>], iteration_bounds = array<i64: 1>, scalar_prefetch = 0 : i64, scratch_operands = 0 : i64, tpu.core_type = #tpu.core_type<tc>, window_params = [{transform_indices = @transform_0, window_bounds = array<i64: 2, 16, 128>}, {transform_indices = @transform_1, window_bounds = array<i64: 2, 128>}, {pipeline_mode = #tpu.pipeline_mode<synchronous>, transform_indices = @transform_2, window_bounds = array<i64: 128, 128>}, {pipeline_mode = #tpu.pipeline_mode<synchronous>, transform_indices = @transform_3, window_bounds = array<i64: 128, 128>}, {pipeline_mode = #tpu.pipeline_mode<synchronous>, transform_indices = @transform_4, window_bounds = array<i64: 1, 128>}, {pipeline_mode = #tpu.pipeline_mode<synchronous>, transform_indices = @transform_5, window_bounds = array<i64: 1, 128>}, {pipeline_mode = #tpu.pipeline_mode<synchronous>, transform_indices = @transform_6, window_bounds = array<i64: 1, 1>}, {transform_indices = @transform_7, window_bounds = array<i64: 2, 128>}]} {
    %c0 = arith.constant 0 : index
    %c0_0 = arith.constant 0 : index
    %c0_1 = arith.constant 0 : index
    %0 = vector.load %arg1[%c0, %c0_0, %c0_1] : memref<2x16x128xf32, #tpu.memory_space<vmem>>, vector<2x16x128xf32>
    %c0_2 = arith.constant 0 : index
    %c0_3 = arith.constant 0 : index
    %1 = vector.load %arg2[%c0_2, %c0_3] : memref<2x128xf32, #tpu.memory_space<vmem>>, vector<2x128xf32>
    %2 = vector.shape_cast %0 : vector<2x16x128xf32> to vector<32x128xf32>
    %c0_4 = arith.constant 0 : index
    %c0_5 = arith.constant 0 : index
    %3 = vector.load %arg3[%c0_4, %c0_5] : memref<128x128xf32, #tpu.memory_space<vmem>>, vector<128x128xf32>
    %cst = arith.constant dense<0.000000e+00> : vector<32x128xf32>
    %4 = tpu.matmul %2, %3, %cst {dimension_numbers = #tpu.dot_dimension_numbers<[1], [0], [0], [1], [0, 0, 1, 1], [], []>} : vector<32x128xf32>, vector<128x128xf32>, vector<32x128xf32> -> vector<32x128xf32>
    %c0_6 = arith.constant 0 : index
    %c0_7 = arith.constant 0 : index
    %5 = vector.load %arg4[%c0_6, %c0_7] : memref<128x128xf32, #tpu.memory_space<vmem>>, vector<128x128xf32>
    %cst_8 = arith.constant dense<0.000000e+00> : vector<2x128xf32>
    %6 = tpu.matmul %1, %5, %cst_8 {dimension_numbers = #tpu.dot_dimension_numbers<[1], [0], [0], [1], [0, 0, 1, 1], [], []>} : vector<2x128xf32>, vector<128x128xf32>, vector<2x128xf32> -> vector<2x128xf32>
    %c0_9 = arith.constant 0 : index
    %c0_10 = arith.constant 0 : index
    %7 = vector.load %arg5[%c0_9, %c0_10] : memref<1x128xf32, #tpu.memory_space<vmem>>, vector<1x128xf32>
    %8 = vector.broadcast %7 : vector<1x128xf32> to vector<2x128xf32>
    %9 = arith.addf %6, %8 : vector<2x128xf32>
    %10 = vector.shape_cast %4 : vector<32x128xf32> to vector<2x16x128xf32>
    %11 = vector.shape_cast %9 : vector<2x128xf32> to vector<2x1x128xf32>
    %12 = vector.broadcast %11 : vector<2x1x128xf32> to vector<2x16x128xf32>
    %13 = arith.addf %10, %12 : vector<2x16x128xf32>
    %14 = math.tanh %13 : vector<2x16x128xf32>
    %c0_11 = arith.constant 0 : index
    %c0_12 = arith.constant 0 : index
    %15 = vector.load %arg6[%c0_11, %c0_12] : memref<1x128xf32, #tpu.memory_space<vmem>>, vector<1x128xf32>
    %16 = vector.shape_cast %15 : vector<1x128xf32> to vector<1x1x128xf32>
    %17 = vector.broadcast %16 : vector<1x1x128xf32> to vector<2x16x128xf32>
    %18 = arith.mulf %14, %17 : vector<2x16x128xf32>
    %cst_13 = arith.constant dense<0.000000e+00> : vector<2x16xf32>
    %19 = vector.multi_reduction <add>, %18, %cst_13 [2] : vector<2x16x128xf32> to vector<2x16xf32>
    %20 = vector.shape_cast %19 : vector<2x16xf32> to vector<2x16x1xf32>
    %c0_14 = arith.constant 0 : index
    %c0_15 = arith.constant 0 : index
    %21 = vector.load %arg7[%c0_14, %c0_15] : memref<1x1xf32, #tpu.memory_space<vmem>>, vector<1x1xf32>
    %22 = vector.shape_cast %21 : vector<1x1xf32> to vector<1x1x1xf32>
    %23 = vector.broadcast %22 : vector<1x1x1xf32> to vector<2x16x1xf32>
    %24 = arith.addf %20, %23 : vector<2x16x1xf32>
    %cst_16 = arith.constant dense<0xFF800000> : vector<2x1xf32>
    %25 = vector.multi_reduction <maximumf>, %24, %cst_16 [1] : vector<2x16x1xf32> to vector<2x1xf32>
    %26 = vector.shape_cast %25 : vector<2x1xf32> to vector<2x1x1xf32>
    %27 = vector.broadcast %26 : vector<2x1x1xf32> to vector<2x16x1xf32>
    %28 = arith.subf %24, %27 : vector<2x16x1xf32>
    %29 = math.exp %28 : vector<2x16x1xf32>
    %cst_17 = arith.constant dense<0.000000e+00> : vector<2x1xf32>
    %30 = vector.multi_reduction <add>, %29, %cst_17 [1] : vector<2x16x1xf32> to vector<2x1xf32>
    %31 = vector.shape_cast %30 : vector<2x1xf32> to vector<2x1x1xf32>
    %32 = vector.broadcast %31 : vector<2x1x1xf32> to vector<2x16x1xf32>
    %33 = arith.divf %29, %32 : vector<2x16x1xf32>
    %34 = vector.broadcast %33 : vector<2x16x1xf32> to vector<2x16x128xf32>
    %35 = arith.mulf %34, %0 : vector<2x16x128xf32>
    %cst_18 = arith.constant dense<0.000000e+00> : vector<2x128xf32>
    %36 = vector.multi_reduction <add>, %35, %cst_18 [1] : vector<2x16x128xf32> to vector<2x128xf32>
    %37 = arith.addf %36, %1 : vector<2x128xf32>
    %c0_19 = arith.constant 0 : index
    %c0_20 = arith.constant 0 : index
    %38 = vector.load %arg8[%c0_19, %c0_20] : memref<2x128xf32, #tpu.memory_space<vmem>>, vector<2x128xf32>
    tpu.vector_store %arg8[%c0_19, %c0_20], %37 {strides = array<i32>} : memref<2x128xf32, #tpu.memory_space<vmem>>, vector<2x128xf32>,
    return
  }
  func.func @transform_0(%arg0: i32) -> (i32, i32, i32) {
    %c0_i32 = arith.constant 0 : i32
    %c0_i32_0 = arith.constant 0 : i32
    %c0_i32_1 = arith.constant 0 : i32
    return %arg0, %c0_i32, %c0_i32_0 : i32, i32, i32
  }
  func.func @transform_1(%arg0: i32) -> (i32, i32) {
    %c0_i32 = arith.constant 0 : i32
    %c0_i32_0 = arith.constant 0 : i32
    return %arg0, %c0_i32 : i32, i32
  }
  func.func @transform_2(%arg0: i32) -> (i32, i32) {
    %c0_i32 = arith.constant 0 : i32
    %c0_i32_0 = arith.constant 0 : i32
    %c0_i32_1 = arith.constant 0 : i32
    return %c0_i32, %c0_i32_0 : i32, i32
  }
  func.func @transform_3(%arg0: i32) -> (i32, i32) {
    %c0_i32 = arith.constant 0 : i32
    %c0_i32_0 = arith.constant 0 : i32
    %c0_i32_1 = arith.constant 0 : i32
    return %c0_i32, %c0_i32_0 : i32, i32
  }
  func.func @transform_4(%arg0: i32) -> (i32, i32) {
    %c0_i32 = arith.constant 0 : i32
    %c0_i32_0 = arith.constant 0 : i32
    %c0_i32_1 = arith.constant 0 : i32
    return %c0_i32, %c0_i32_0 : i32, i32
  }
  func.func @transform_5(%arg0: i32) -> (i32, i32) {
    %c0_i32 = arith.constant 0 : i32
    %c0_i32_0 = arith.constant 0 : i32
    %c0_i32_1 = arith.constant 0 : i32
    return %c0_i32, %c0_i32_0 : i32, i32
  }
  func.func @transform_6(%arg0: i32) -> (i32, i32) {
    %c0_i32 = arith.constant 0 : i32
    %c0_i32_0 = arith.constant 0 : i32
    %c0_i32_1 = arith.constant 0 : i32
    return %c0_i32, %c0_i32_0 : i32, i32
  }
  func.func @transform_7(%arg0: i32) -> (i32, i32) {
    %c0_i32 = arith.constant 0 : i32
    %c0_i32_0 = arith.constant 0 : i32
    return %arg0, %c0_i32 : i32, i32
  }
}

</mosaic_0001>

<llo_original>
// kernel: tpu_custom_call.1
$region0: #{tpu_custom_call.1}
  #allocation0 [shape = 'u32[]', space=smem, size = 0x4, offset = 0x4, fixed_abs, tag = 'smem constant byte address 0x4 - core index']
  #allocation1 [shape = 'u32[144,128]{1,0:T(1,128)}', space=vmem, size = 0x12000, scoped, tag = 'internal scratch']
  #allocation2 [shape = 'f32[1,1]{1,0:T(1,128)S(1)}', space=vmem, size = 0x200, scoped, tag = 'scoped memory for tpu_custom_call.1']
  %s0 = inlined_call_operand.hbm [shape: f32[2,16,128], index: 0, kind: input, shape index: {}]
  %s1 = inlined_call_operand.vmem [shape: f32[2,128], index: 1, kind: input, shape index: {}]
  %s2 = inlined_call_operand.hbm [shape: f32[128,128], index: 2, kind: input, shape index: {}]
  %s3 = inlined_call_operand.hbm [shape: f32[128,128], index: 3, kind: input, shape index: {}]
  %s4 = inlined_call_operand.vmem [shape: f32[1,128], index: 4, kind: input, shape index: {}]
  %s5 = inlined_call_operand.vmem [shape: f32[1,128], index: 5, kind: input, shape index: {}]
  %s6 = inlined_call_operand.<no memory space> [shape: f32[1,1], index: 6, kind: input, shape index: {}]
  %s7 = inlined_call_operand.hbm [shape: f32[2,128], index: 7, kind: output, shape index: {}]
  %s8 = sld [smem:[#allocation0]]
  $region50: #{tpu_custom_call.1} parent=0
    _
  %s10 = ssub.s32 1, %s8
  %s11 = scalar_select 0, %s10, %s8
  %v12 = vstv %s6
  %13 = vst [vmem:[#allocation2] sm:$0x1] %v12
  $region1: #{tpu_custom_call.1} parent=0
    #allocation3 [shape = 'u8[16384]{0}', space=vmem, size = 0x4000, scoped, tag = 'input window, operand 0, single buffered']
    #allocation4 [shape = 's32[1]{0}', space=sflag, size = 0x4, scoped, tag = 'scoped memory for tpu_custom_call.1']
    #allocation5 [shape = 's32[1]{0}', space=sflag, size = 0x4, scoped, tag = 'scoped memory for tpu_custom_call.1']
    #allocation6 [shape = 'u8[65536]{0}', space=vmem, size = 0x10000, scoped, tag = 'input window, operand 2, single buffered']
    #allocation7 [shape = 's32[1]{0}', space=sflag, size = 0x4, scoped, tag = 'scoped memory for tpu_custom_call.1']
    #allocation8 [shape = 'u8[65536]{0}', space=vmem, size = 0x10000, scoped, tag = 'input window, operand 3, single buffered']
    #allocation9 [shape = 'u8[1024]{0}', space=vmem, size = 0x400, scoped, tag = 'output window, operand 0, single buffered']
    %14 = vsyncpa [#allocation4], 0
    %15 = vsyncpa [#allocation7], 0
    %16 = vsyncpa [#allocation5], 0
    // Predicated region
    $region2: #{tpu_custom_call.1} parent=1 // pred_check
      _
    $region3: #{tpu_custom_call.1} parent=1 // pred_check_branch
      %18 = sbr.rel (0) target = $region5
    $region4: #{tpu_custom_call.1} parent=1 // pred_region
      %s20 = ssub.s32 512, 512
      %21 = vsyncadd [#allocation4], %s20
      %s22 = sshll.u32 [#allocation3], 4
      %s23 = int_to_ptr.vmem [resolvable:$true] %s22
      %28 = dma.hbm_to_vmem [thread:$0]  %s0, 512, %s23, [#allocation4], 128, 128, 8
    $region5: #{tpu_custom_call.1} parent=1 // pred_fallthru
      _
    // Predicated region
    $region6: #{tpu_custom_call.1} parent=1 // pred_check
      _
    $region7: #{tpu_custom_call.1} parent=1 // pred_check_branch
      %30 = sbr.rel (0) target = $region9
    $region8: #{tpu_custom_call.1} parent=1 // pred_region
      _
    $region9: #{tpu_custom_call.1} parent=1 // pred_fallthru
      _
    // Predicated region
    $region10: #{tpu_custom_call.1} parent=1 // pred_check
      _
    $region11: #{tpu_custom_call.1} parent=1 // pred_check_branch
      %32 = sbr.rel (0) target = $region13
    $region12: #{tpu_custom_call.1} parent=1 // pred_region
      %s34 = ssub.s32 2048, 2048
      %35 = vsyncadd [#allocation7], %s34
      %s36 = sshll.u32 [#allocation6], 4
      %s37 = int_to_ptr.vmem [resolvable:$true] %s36
      %42 = dma.hbm_to_vmem [thread:$0]  %s2, 2048, %s37, [#allocation7], 128, 128, 8
    $region13: #{tpu_custom_call.1} parent=1 // pred_fallthru
      _
    // Predicated region
    $region14: #{tpu_custom_call.1} parent=1 // pred_check
      _
    $region15: #{tpu_custom_call.1} parent=1 // pred_check_branch
      %44 = sbr.rel (0) target = $region17
    $region16: #{tpu_custom_call.1} parent=1 // pred_region
      %s46 = ssub.s32 2048, 2048
      %47 = vsyncadd [#allocation7], %s46
      %s48 = sshll.u32 [#allocation8], 4
      %s49 = int_to_ptr.vmem [resolvable:$true] %s48
      %54 = dma.hbm_to_vmem [thread:$0]  %s3, 2048, %s49, [#allocation7], 128, 128, 8
    $region17: #{tpu_custom_call.1} parent=1 // pred_fallthru
      _
    // Predicated region
    $region18: #{tpu_custom_call.1} parent=1 // pred_check
      _
    $region19: #{tpu_custom_call.1} parent=1 // pred_check_branch
      %56 = sbr.rel (0) target = $region21
    $region20: #{tpu_custom_call.1} parent=1 // pred_region
      _
    $region21: #{tpu_custom_call.1} parent=1 // pred_fallthru
      _
    // Predicated region
    $region22: #{tpu_custom_call.1} parent=1 // pred_check
      _
    $region23: #{tpu_custom_call.1} parent=1 // pred_check_branch
      %58 = sbr.rel (0) target = $region25
    $region24: #{tpu_custom_call.1} parent=1 // pred_region
      _
    $region25: #{tpu_custom_call.1} parent=1 // pred_fallthru
      _
    // Predicated region
    $region26: #{tpu_custom_call.1} parent=1 // pred_check
      _
    $region27: #{tpu_custom_call.1} parent=1 // pred_check_branch
      %60 = sbr.rel (0) target = $region29
    $region28: #{tpu_custom_call.1} parent=1 // pred_region
      _
    $region29: #{tpu_custom_call.1} parent=1 // pred_fallthru
      _
    // Predicated region
    $region30: #{tpu_custom_call.1} parent=1 // pred_check
      _
    $region31: #{tpu_custom_call.1} parent=1 // pred_check_branch
      %62 = sbr.rel (0) target = $region33
    $region32: #{tpu_custom_call.1} parent=1 // pred_region
      %63 = dma.done [#allocation4], 512
    $region33: #{tpu_custom_call.1} parent=1 // pred_fallthru
      _
    // Predicated region
    $region34: #{tpu_custom_call.1} parent=1 // pred_check
      _
    $region35: #{tpu_custom_call.1} parent=1 // pred_check_branch
      %65 = sbr.rel (0) target = $region37
    $region36: #{tpu_custom_call.1} parent=1 // pred_region
      %66 = dma.done [#allocation7], 2048
    $region37: #{tpu_custom_call.1} parent=1 // pred_fallthru
      _
    // Predicated region
    $region38: #{tpu_custom_call.1} parent=1 // pred_check
      _
    $region39: #{tpu_custom_call.1} parent=1 // pred_check_branch
      %68 = sbr.rel (0) target = $region41
    $region40: #{tpu_custom_call.1} parent=1 // pred_region
      %69 = dma.done [#allocation7], 2048
    $region41: #{tpu_custom_call.1} parent=1 // pred_fallthru
      _
    %v70 = vld [vmem:[#allocation3] sm:$0xff]
    %v71 = vld [vmem:[#allocation3 + $0x8] sm:$0xff]
    %v72 = vld [vmem:[#allocation3 + $0x10] sm:$0xff]
    %v73 = vld [vmem:[#allocation3 + $0x18] sm:$0xff]
    %v74 = vld [vmem:[%s1] sm:$0x3]
    %v75 = vld [vmem:[#allocation6] sm:$0xff]
    %v76 = vld [vmem:[#allocation6 + $0x8] sm:$0xff]
    %v77 = vld [vmem:[#allocation6 + $0x10] sm:$0xff]
    %v78 = vld [vmem:[#allocation6 + $0x18] sm:$0xff]
    %v79 = vld [vmem:[#allocation6 + $0x20] sm:$0xff]
    %v80 = vld [vmem:[#allocation6 + $0x28] sm:$0xff]
    %v81 = vld [vmem:[#allocation6 + $0x30] sm:$0xff]
    %v82 = vld [vmem:[#allocation6 + $0x38] sm:$0xff]
    %v83 = vld [vmem:[#allocation6 + $0x40] sm:$0xff]
    %v84 = vld [vmem:[#allocation6 + $0x48] sm:$0xff]
    %v85 = vld [vmem:[#allocation6 + $0x50] sm:$0xff]
    %v86 = vld [vmem:[#allocation6 + $0x58] sm:$0xff]
    %v87 = vld [vmem:[#allocation6 + $0x60] sm:$0xff]
    %v88 = vld [vmem:[#allocation6 + $0x68] sm:$0xff]
    %v89 = vld [vmem:[#allocation6 + $0x70] sm:$0xff]
    %v90 = vld [vmem:[#allocation6 + $0x78] sm:$0xff]
    %91 = vmatprep.subr.mxu0 0.0
    %92 = vmatpush1.msra.mxu0 %v75
    %93 = vmatprep.subr.mxu0 0.0
    %94 = vmatpush1.msra.mxu0 %v76
    %95 = vmatprep.subr.mxu0 0.0
    %96 = vmatpush1.msra.mxu0 %v77
    %97 = vmatprep.subr.mxu0 0.0
    %98 = vmatpush1.msra.mxu0 %v78
    %99 = vmatprep.subr.mxu0 0.0
    %100 = vmatpush1.msra.mxu0 %v79
    %101 = vmatprep.subr.mxu0 0.0
    %102 = vmatpush1.msra.mxu0 %v80
    %103 = vmatprep.subr.mxu0 0.0
    %104 = vmatpush1.msra.mxu0 %v81
    %105 = vmatprep.subr.mxu0 0.0
    %106 = vmatpush1.msra.mxu0 %v82
    %107 = vmatprep.subr.mxu0 0.0
    %108 = vmatpush1.msra.mxu0 %v83
    %109 = vmatprep.subr.mxu0 0.0
    %110 = vmatpush1.msra.mxu0 %v84
    %111 = vmatprep.subr.mxu0 0.0
    %112 = vmatpush1.msra.mxu0 %v85
    %113 = vmatprep.subr.mxu0 0.0
    %114 = vmatpush1.msra.mxu0 %v86
    %115 = vmatprep.subr.mxu0 0.0
    %116 = vmatpush1.msra.mxu0 %v87
    %117 = vmatprep.subr.mxu0 0.0
    %118 = vmatpush1.msra.mxu0 %v88
    %119 = vmatprep.subr.mxu0 0.0
    %120 = vmatpush1.msra.mxu0 %v89
    %121 = vmatprep.subr.mxu0 0.0
    %122 = vmatpush1.msra.mxu0 %v90
    %123 = vmatprep.subr.mxu0 0.0
    %124 = vmatpush1.msra.mxu0 0.0
    %125 = vmatprep.subr.mxu0 0.0
    %126 = vmatpush1.msra.mxu0 0.0
    %127 = vmatprep.subr.mxu0 0.0
    %128 = vmatpush1.msra.mxu0 0.0
    %129 = vmatprep.subr.mxu0 0.0
    %130 = vmatpush1.msra.mxu0 0.0
    %131 = vmatprep.subr.mxu0 0.0
    %132 = vmatpush1.msra.mxu0 0.0
    %133 = vmatprep.subr.mxu0 0.0
    %134 = vmatpush1.msra.mxu0 0.0
    %135 = vmatprep.subr.mxu0 0.0
    %136 = vmatpush1.msra.mxu0 0.0
    %137 = vmatprep.subr.mxu0 0.0
    %138 = vmatpush1.msra.mxu0 0.0
    %139 = vmatprep.subr.mxu0 0.0
    %140 = vmatpush1.msra.mxu0 0.0
    %141 = vmatprep.subr.mxu0 0.0
    %142 = vmatpush1.msra.mxu0 0.0
    %143 = vmatprep.subr.mxu0 0.0
    %144 = vmatpush1.msra.mxu0 0.0
    %145 = vmatprep.subr.mxu0 0.0
    %146 = vmatpush1.msra.mxu0 0.0
    %147 = vmatprep.subr.mxu0 0.0
    %148 = vmatpush1.msra.mxu0 0.0
    %149 = vmatprep.subr.mxu0 0.0
    %150 = vmatpush1.msra.mxu0 0.0
    %151 = vmatprep.subr.mxu0 0.0
    %152 = vmatpush1.msra.mxu0 0.0
    %153 = vmatprep.subr.mxu0 0.0
    %154 = vmatpush1.msra.mxu0 0.0
    %155 = vmatprep.mubr.f32.mxu0 0.0
    %156 = vmatmul.mubr.f32.gmra.mrb[0].mxu0 %v70
    %v157 = vpop.f32.mrb[0].mxu0
    %v158 = vadd.f32 0.0, %v157
    %v159 = vpop.f32.mrb[0].mxu0
    %160 = vmatprep.mubr.f32.mxu0 0.0
    %161 = vmatmul.mubr.f32.gmra.mrb[0].mxu0 %v71
    %v162 = vpop.f32.mrb[0].mxu0
    %v163 = vadd.f32 0.0, %v162
    %v164 = vpop.f32.mrb[0].mxu0
    %165 = vmatprep.mubr.f32.mxu0 0.0
    %166 = vmatmul.mubr.f32.gmra.mrb[0].mxu0 %v72
    %v167 = vpop.f32.mrb[0].mxu0
    %v168 = vadd.f32 0.0, %v167
    %v169 = vpop.f32.mrb[0].mxu0
    %170 = vmatprep.mubr.f32.mxu0 0.0
    %171 = vmatmul.mubr.f32.gmra.mrb[0].mxu0 %v73
    %v172 = vpop.f32.mrb[0].mxu0
    %v173 = vadd.f32 0.0, %v172
    %v174 = vpop.f32.mrb[0].mxu0
    %175 = vdwg.mxu0
    %v176 = vld [vmem:[#allocation8] sm:$0xff]
    %v177 = vld [vmem:[#allocation8 + $0x8] sm:$0xff]
    %v178 = vld [vmem:[#allocation8 + $0x10] sm:$0xff]
    %v179 = vld [vmem:[#allocation8 + $0x18] sm:$0xff]
    %v180 = vld [vmem:[#allocation8 + $0x20] sm:$0xff]
    %v181 = vld [vmem:[#allocation8 + $0x28] sm:$0xff]
    %v182 = vld [vmem:[#allocation8 + $0x30] sm:$0xff]
    %v183 = vld [vmem:[#allocation8 + $0x38] sm:$0xff]
    %v184 = vld [vmem:[#allocation8 + $0x40] sm:$0xff]
    %v185 = vld [vmem:[#allocation8 + $0x48] sm:$0xff]
    %v186 = vld [vmem:[#allocation8 + $0x50] sm:$0xff]
    %v187 = vld [vmem:[#allocation8 + $0x58] sm:$0xff]
    %v188 = vld [vmem:[#allocation8 + $0x60] sm:$0xff]
    %v189 = vld [vmem:[#allocation8 + $0x68] sm:$0xff]
    %v190 = vld [vmem:[#allocation8 + $0x70] sm:$0xff]
    %v191 = vld [vmem:[#allocation8 + $0x78] sm:$0xff]
    %v192 = vld [vmem:[%s4] sm:$0x1]
    %v194 = vlaneseq
    %v195 = vshrl.u32 %v194, 7
    %v196 = vsub.s32 0, %v195
    %v197 = vrot.slane %v192, %v196
    %199 = vmatprep.subr.mxu0 0.0
    %200 = vmatpush1.msra.mxu0 %v176
    %201 = vmatprep.subr.mxu0 0.0
    %202 = vmatpush1.msra.mxu0 %v177
    %203 = vmatprep.subr.mxu0 0.0
    %204 = vmatpush1.msra.mxu0 %v178
    %205 = vmatprep.subr.mxu0 0.0
    %206 = vmatpush1.msra.mxu0 %v179
    %207 = vmatprep.subr.mxu0 0.0
    %208 = vmatpush1.msra.mxu0 %v180
    %209 = vmatprep.subr.mxu0 0.0
    %210 = vmatpush1.msra.mxu0 %v181
    %211 = vmatprep.subr.mxu0 0.0
    %212 = vmatpush1.msra.mxu0 %v182
    %213 = vmatprep.subr.mxu0 0.0
    %214 = vmatpush1.msra.mxu0 %v183
    %215 = vmatprep.subr.mxu0 0.0
    %216 = vmatpush1.msra.mxu0 %v184
    %217 = vmatprep.subr.mxu0 0.0
    %218 = vmatpush1.msra.mxu0 %v185
    %219 = vmatprep.subr.mxu0 0.0
    %220 = vmatpush1.msra.mxu0 %v186
    %221 = vmatprep.subr.mxu0 0.0
    %222 = vmatpush1.msra.mxu0 %v187
    %223 = vmatprep.subr.mxu0 0.0
    %224 = vmatpush1.msra.mxu0 %v188
    %225 = vmatprep.subr.mxu0 0.0
    %226 = vmatpush1.msra.mxu0 %v189
    %227 = vmatprep.subr.mxu0 0.0
    %228 = vmatpush1.msra.mxu0 %v190
    %229 = vmatprep.subr.mxu0 0.0
    %230 = vmatpush1.msra.mxu0 %v191
    %231 = vmatprep.subr.mxu0 0.0
    %232 = vmatpush1.msra.mxu0 0.0
    %233 = vmatprep.subr.mxu0 0.0
    %234 = vmatpush1.msra.mxu0 0.0
    %235 = vmatprep.subr.mxu0 0.0
    %236 = vmatpush1.msra.mxu0 0.0
    %237 = vmatprep.subr.mxu0 0.0
    %238 = vmatpush1.msra.mxu0 0.0
    %239 = vmatprep.subr.mxu0 0.0
    %240 = vmatpush1.msra.mxu0 0.0
    %241 = vmatprep.subr.mxu0 0.0
    %242 = vmatpush1.msra.mxu0 0.0
    %243 = vmatprep.subr.mxu0 0.0
    %244 = vmatpush1.msra.mxu0 0.0
    %245 = vmatprep.subr.mxu0 0.0
    %246 = vmatpush1.msra.mxu0 0.0
    %247 = vmatprep.subr.mxu0 0.0
    %248 = vmatpush1.msra.mxu0 0.0
    %249 = vmatprep.subr.mxu0 0.0
    %250 = vmatpush1.msra.mxu0 0.0
    %251 = vmatprep.subr.mxu0 0.0
    %252 = vmatpush1.msra.mxu0 0.0
    %253 = vmatprep.subr.mxu0 0.0
    %254 = vmatpush1.msra.mxu0 0.0
    %255 = vmatprep.subr.mxu0 0.0
    %256 = vmatpush1.msra.mxu0 0.0
    %257 = vmatprep.subr.mxu0 0.0
    %258 = vmatpush1.msra.mxu0 0.0
    %259 = vmatprep.subr.mxu0 0.0
    %260 = vmatpush1.msra.mxu0 0.0
    %261 = vmatprep.subr.mxu0 0.0
    %262 = vmatpush1.msra.mxu0 0.0
    %263 = vmatprep.mubr.f32.mxu0 0.0
    %264 = vmatmul.mubr.f32.gmra.mrb[0].mxu0 %v74
    %v265 = vpop.f32.mrb[0].mxu0
    %v266 = vadd.f32 %v197, %v265
    %v267 = vpop.f32.mrb[0].mxu0
    %268 = vdwg.mxu0
    %v271 = vunpack.c.l.s4 1966171168
    %v272 = vunpack.c.0.s8 %v271
    %v273 = vlaneseq
    %v274 = vshrl.u32 %v273, 7
    %v275 = vsub.s32 %v272, %v274
    %v276 = vrot.slane %v266, %v275
    %v277 = vcombine.high %v276, %v276
    %v279 = vunpack.c.l.s4 1966171168
    %v280 = vunpack.c.0.s8 %v279
    %v281 = vlaneseq
    %v282 = vshrl.u32 %v281, 7
    %v283 = vsub.s32 %v280, %v282
    %v284 = vrot.slane %v276, %v283
    %v286 = vunpack.c.l.s4 1966171168
    %v287 = vunpack.c.0.s8 %v286
    %v288 = vlaneseq
    %v289 = vshrl.u32 %v288, 7
    %v290 = vsub.s32 %v287, %v289
    %v291 = vrot.slane %v277, %v290
    %v292 = vlaneseq
    %v293 = vshrl.u32 %v292, 7
    %v294 = vsub.s32 0, %v293
    %v295 = vrot.slane %v284, %v294
    %v296 = vlaneseq
    %v297 = vshrl.u32 %v296, 7
    %v298 = vsub.s32 0, %v297
    %v299 = vrot.slane %v291, %v298
    %v302 = vadd.f32 %v158, %v295
    %v303 = vadd.f32 %v163, %v295
    %v304 = vadd.f32 %v168, %v299
    %v305 = vadd.f32 %v173, %v299
    %v306 = vtanh.pop %v302
    %v307 = vtanh.pop %v303
    %v308 = vtanh.pop %v304
    %v309 = vtanh.pop %v305
    %v310 = vld [vmem:[%s5] sm:$0x1]
    %v312 = vlaneseq
    %v313 = vshrl.u32 %v312, 7
    %v314 = vsub.s32 0, %v313
    %v315 = vrot.slane %v310, %v314
    %v317 = vmul.f32 %v306, %v315
    %v318 = vmul.f32 %v307, %v315
    %v319 = vmul.f32 %v308, %v315
    %v320 = vmul.f32 %v309, %v315
    %321 = vadd.xlane.f32.xlu0 %v317
    %v322 = vpop.xlane.xlu0 %321
    %323 = vadd.xlane.f32.xlu0 %v318
    %v324 = vpop.xlane.xlu0 %323
    %325 = vadd.xlane.f32.xlu0 %v319
    %v326 = vpop.xlane.xlu0 %325
    %327 = vadd.xlane.f32.xlu0 %v320
    %v328 = vpop.xlane.xlu0 %327
    %v329 = vld [vmem:[#allocation2] sm:$0x1]
    %v331 = vlaneseq
    %v332 = vshrl.u32 %v331, 7
    %v333 = vsub.s32 0, %v332
    %v334 = vrot.slane %v329, %v333
    %v336 = vadd.f32 %v322, %v334
    %v337 = vadd.f32 %v324, %v334
    %v338 = vadd.f32 %v326, %v334
    %v339 = vadd.f32 %v328, %v334
    %vm340 = vcmask 7168
    %v341 = vsel %vm340, %v336, -inf
    %v342 = vsel %vm340, %v337, -inf
    %v343 = vmax.f32 %v341, %v342
    %v344 = vrot.slane %v343, 4
    %v345 = vmax.f32 %v343, %v344
    %v346 = vrot.slane %v345, 2
    %v347 = vmax.f32 %v345, %v346
    %v348 = vrot.slane %v347, 1
    %v349 = vmax.f32 %v347, %v348
    %v350 = vsel %vm340, %v338, -inf
    %v351 = vsel %vm340, %v339, -inf
    %v352 = vmax.f32 %v350, %v351
    %v353 = vrot.slane %v352, 4
    %v354 = vmax.f32 %v352, %v353
    %v355 = vrot.slane %v354, 2
    %v356 = vmax.f32 %v354, %v355
    %v357 = vrot.slane %v356, 1
    %v358 = vmax.f32 %v356, %v357
    %v359 = vsub.f32 %v336, %v349
    %v360 = vsub.f32 %v337, %v349
    %v361 = vsub.f32 %v338, %v358
    %v362 = vsub.f32 %v339, %v358
    %v363 = vmul.f32 %v359, 1.442695
    %v364 = vpow.pop %v363
    %v365 = vmul.f32 %v360, 1.442695
    %v366 = vpow.pop %v365
    %v367 = vmul.f32 %v361, 1.442695
    %v368 = vpow.pop %v367
    %v369 = vmul.f32 %v362, 1.442695
    %v370 = vpow.pop %v369
    %v371 = vsel %vm340, %v364, 0.0
    %v372 = vsel %vm340, %v366, 0.0
    %v373 = vadd.f32 %v371, %v372
    %v374 = vrot.slane %v373, 4
    %v375 = vadd.f32 %v373, %v374
    %v376 = vrot.slane %v375, 2
    %v377 = vadd.f32 %v375, %v376
    %v378 = vrot.slane %v377, 1
    %v379 = vadd.f32 %v377, %v378
    %v380 = vsel %vm340, %v368, 0.0
    %v381 = vsel %vm340, %v370, 0.0
    %v382 = vadd.f32 %v380, %v381
    %v383 = vrot.slane %v382, 4
    %v384 = vadd.f32 %v382, %v383
    %v385 = vrot.slane %v384, 2
    %v386 = vadd.f32 %v384, %v385
    %v387 = vrot.slane %v386, 1
    %v388 = vadd.f32 %v386, %v387
    %v389 = vrcp.pop %v379
    %v390 = vmul.f32 %v364, %v389
    %v391 = vmul.f32 %v366, %v389
    %v392 = vrcp.pop %v388
    %v393 = vmul.f32 %v368, %v392
    %v394 = vmul.f32 %v370, %v392
    %396 = vset.pattern.permute.xlu0 0
    %397 = vperm.xlu0 %396, %v390
    %v398 = vpop.permute.xlu0 %397
    %401 = vset.pattern.permute.xlu0 0
    %402 = vperm.xlu0 %401, %v391
    %v403 = vpop.permute.xlu0 %402
    %406 = vset.pattern.permute.xlu0 0
    %407 = vperm.xlu0 %406, %v393
    %v408 = vpop.permute.xlu0 %407
    %411 = vset.pattern.permute.xlu0 0
    %412 = vperm.xlu0 %411, %v394
    %v413 = vpop.permute.xlu0 %412
    %v415 = vmul.f32 %v398, %v70
    %v416 = vmul.f32 %v403, %v71
    %v417 = vmul.f32 %v408, %v72
    %v418 = vmul.f32 %v413, %v73
    %v419 = vadd.f32 %v415, %v416
    %v420 = vrot.slane %v419, 4
    %v421 = vadd.f32 %v419, %v420
    %v422 = vrot.slane %v421, 2
    %v423 = vadd.f32 %v421, %v422
    %v424 = vrot.slane %v423, 1
    %v425 = vadd.f32 %v423, %v424
    %v426 = vadd.f32 %v417, %v418
    %v427 = vrot.slane %v426, 4
    %v428 = vadd.f32 %v426, %v427
    %v429 = vrot.slane %v428, 2
    %v430 = vadd.f32 %v428, %v429
    %v431 = vrot.slane %v430, 1
    %v432 = vadd.f32 %v430, %v431
    %v434 = vrot.slane %v74, 1
    %v437 = vadd.f32 %v425, %v74
    %v438 = vadd.f32 %v432, %v434
    %v441 = vrot.slane %v438, 7
    %vm442 = vcmask 1041409
    %v443 = vsel %vm442, %v441, %v437
    %445 = vst [vmem:[#allocation9] sm:$0x3] %v443
    // Predicated region
    $region42: #{tpu_custom_call.1} parent=1 // pred_check
      _
    $region43: #{tpu_custom_call.1} parent=1 // pred_check_branch
      %447 = sbr.rel (0) target = $region45
    $region44: #{tpu_custom_call.1} parent=1 // pred_region
      %s449 = ssub.s32 32, 32
      %450 = vsyncadd [#allocation5], %s449
      %s452 = sshll.u32 [#allocation9], 4
      %s453 = int_to_ptr.vmem [resolvable:$true] %s452
      %455 = dma.vmem_to_hbm [thread:$0]  %s453, 32, %s7, [#allocation5]
    $region45: #{tpu_custom_call.1} parent=1 // pred_fallthru
      _
    // Predicated region
    $region46: #{tpu_custom_call.1} parent=1 // pred_check
      _
    $region47: #{tpu_custom_call.1} parent=1 // pred_check_branch
      %457 = sbr.rel (0) target = $region49
    $region48: #{tpu_custom_call.1} parent=1 // pred_region
      %458 = dma.done [#allocation5], 32
    $region49: #{tpu_custom_call.1} parent=1 // pred_fallthru
      _
    %459 = vsyncpa [#allocation4], 1
    %460 = vsyncpa [#allocation7], 1
    %461 = vsyncpa [#allocation5], 1

</llo_original>
